<compile_context>
chip_gen: v6e
topology: v6e:2x2x1
jax: 0.10.0
libtpu: 0.0.40
codegen_flags: <defaults>
</compile_context>

<pallas_src>
import jax
import jax.numpy as jnp
from jax.experimental import pallas as pl
from jax.experimental.pallas import tpu as pltpu


def _round_up(x, m):
    return ((x + m - 1) // m) * m


def _cdiv(a, b):
    return (a + b - 1) // b


# Conservative tile budget: v7x has 64 MiB physical VMEM per TensorCore
# (v5e/v6e have 128 MiB), so target well under 64 MiB for the double-buffered
# working set plus compiler headroom.
_VMEM_BUDGET = 40 * 1024 * 1024


def _footprint(tm, tn, tk):
    """Double-buffered VMEM bytes for one grid step's tiles."""
    x_bytes = 2 * tm * tk * 2          # bf16 activations
    w_bytes = 2 * tk * tn * 2          # bf16 weight slab
    o_bytes = 2 * tm * tn * 4          # f32 output tile
    b_bytes = 2 * 1 * tn * 4           # f32 bias row
    return x_bytes + w_bytes + o_bytes + b_bytes


def _choose_tiles(Bp8, Hp, Cp, budget):
    # Batch tile: large, but keep >=2 blocks along B when possible so the
    # "parallel" axis gives both v7x TensorCores work.
    tm = min(512, Bp8)
    if Bp8 >= 16 and Bp8 // tm < 2:
        tm = _round_up(_cdiv(Bp8, 2), 8)
    # Prefer reading x exactly once (whole padded class dim per tile) and the
    # whole reduction per step (tk = Hp); shrink tn, then tm, then tk until the
    # double-buffered tiles fit the VMEM budget.
    tn = Cp
    tk = Hp
    while _footprint(tm, tn, tk) > budget and tn > 512:
        tn = _round_up(tn // 2, 128)
    while _footprint(tm, tn, tk) > budget and tm > 128:
        tm = _round_up(tm // 2, 8)
    while _footprint(tm, tn, tk) > budget and tk > 512:
        tk = _round_up(tk // 2, 128)
    return tm, tn, tk


def _head_kernel_fused(x_ref, w_ref, b_ref, o_ref):
    """Whole-H reduction in one step: o = x @ W + b (f32 accumulate/epilogue)."""
    o_ref[...] = (
        jnp.dot(x_ref[...], w_ref[...], preferred_element_type=jnp.float32)
        + b_ref[...]
    ).astype(o_ref.dtype)


def _head_kernel_ktiled(x_ref, w_ref, b_ref, o_ref):
    """Fallback for very large H: accumulate into the resident f32 output."""
    k = pl.program_id(2)

    @pl.when(k == 0)
    def _():
        # Bias folded into the init — no separate epilogue add.
        o_ref[...] = jnp.broadcast_to(b_ref[...], o_ref.shape).astype(o_ref.dtype)

    o_ref[...] += jnp.dot(x_ref[...], w_ref[...], preferred_element_type=jnp.float32)


def classifier_forward(instances, weight, bias):
    """Pallas wrapper: [B,H] x [H,C] + [1,C] -> [B,C] label scores (f32)."""
    B, H = instances.shape
    Hw, C = weight.shape
    assert H == Hw and bias.shape == (1, C)

    Bp8 = _round_up(B, 8)
    Hp0 = _round_up(H, 128)
    Cp0 = _round_up(C, 128)
    tm, tn, tk = _choose_tiles(Bp8, Hp0, Cp0, _VMEM_BUDGET)
    Bp = _round_up(Bp8, tm)
    Hp = _round_up(Hp0, tk)
    Cp = _round_up(Cp0, tn)

    # bf16 operands feed the MXU at full rate; cast / pad only when the inputs
    # do not already conform, so the wrapper adds no extra full-HBM passes in
    # the common (bf16, aligned) case.  Zero-padding H is reduction-neutral.
    x = instances if instances.dtype == jnp.bfloat16 else instances.astype(jnp.bfloat16)
    w = weight if weight.dtype == jnp.bfloat16 else weight.astype(jnp.bfloat16)
    b = bias if bias.dtype == jnp.float32 else bias.astype(jnp.float32)
    if (Bp, Hp) != (B, H):
        x = jnp.pad(x, ((0, Bp - B), (0, Hp - H)))
    if (Hp, Cp) != (H, C):
        w = jnp.pad(w, ((0, Hp - H), (0, Cp - C)))
    if Cp != C:
        b = jnp.pad(b, ((0, 0), (0, Cp - C)))

    n_i = Bp // tm      # batch tiles
    n_j = Cp // tn      # class tiles
    n_k = Hp // tk      # reduction tiles

    vmem_limit = int(
        min(56 * 1024 * 1024,
            max(16 * 1024 * 1024, _footprint(tm, tn, tk) + 4 * 1024 * 1024))
    )

    if n_k == 1:
        # Single-step reduction: class tile j outer, batch tile i inner.  The
        # (Hp, tn) weight slab's block index is independent of i, so Pallas
        # skips its re-DMA across the whole B sweep; x is read exactly once
        # per class tile.
        out = pl.pallas_call(
            _head_kernel_fused,
            out_shape=jax.ShapeDtypeStruct((Bp, Cp), jnp.float32),
            grid_spec=pltpu.PrefetchScalarGridSpec(
                num_scalar_prefetch=0,
                grid=(n_j, n_i),
                in_specs=[
                    pl.BlockSpec((tm, tk), lambda j, i: (i, 0)),
                    pl.BlockSpec((tk, tn), lambda j, i: (0, j)),
                    pl.BlockSpec((1, tn), lambda j, i: (0, j)),
                ],
                out_specs=pl.BlockSpec((tm, tn), lambda j, i: (i, j)),
            ),
            compiler_params=pltpu.CompilerParams(
                dimension_semantics=("parallel", "parallel"),
                vmem_limit_bytes=vmem_limit,
            ),
        )(x, w, b)
    else:
        # Very large H: K-tiled reduction, accumulating into the resident f32
        # output block (its index map is constant over the innermost k axis).
        out = pl.pallas_call(
            _head_kernel_ktiled,
            out_shape=jax.ShapeDtypeStruct((Bp, Cp), jnp.float32),
            grid_spec=pltpu.PrefetchScalarGridSpec(
                num_scalar_prefetch=0,
                grid=(n_j, n_i, n_k),
                in_specs=[
                    pl.BlockSpec((tm, tk), lambda j, i, k: (i, k)),
                    pl.BlockSpec((tk, tn), lambda j, i, k: (k, j)),
                    pl.BlockSpec((1, tn), lambda j, i, k: (0, j)),
                ],
                out_specs=pl.BlockSpec((tm, tn), lambda j, i, k: (i, j)),
            ),
            compiler_params=pltpu.CompilerParams(
                dimension_semantics=("parallel", "parallel", "arbitrary"),
                vmem_limit_bytes=vmem_limit,
            ),
        )(x, w, b)

    if (Bp, Cp) != (B, C):
        out = out[:B, :C]
    return out


class ClassifierPallas:
    """JAX/Pallas analogue of ClassifierHelper.Classifier (inference head only)."""

    def __init__(self, hidden_dim, num_classes, key):
        kw, _ = jax.random.split(key)
        # Parameters stored in the kernel's compute dtypes (bf16 weight, f32
        # bias) so the forward wrapper does not pay extra HBM cast passes.
        self.weight = (
            jax.random.normal(kw, (hidden_dim, num_classes), jnp.float32) * 0.02
        ).astype(jnp.bfloat16)
        self.bias = jnp.zeros((1, num_classes), jnp.float32)

    def __call__(self, instances):
        return classifier_forward(instances, self.weight, self.bias)


if __name__ == "__main__":
    key = jax.random.PRNGKey(0)
    k_x, k_p = jax.random.split(key)

    batch, hidden, num_classes = 8, 32, 16
    instances = jax.random.normal(k_x, (batch, hidden), jnp.float32)

    model = ClassifierPallas(hidden, num_classes, k_p)
    label_scores = model(instances)
    jax.block_until_ready(label_scores)

    # Cross-check against a plain JAX reference using the same bf16-quantized
    # weights (kernel uses bf16 operands with f32 accumulation).
    ref = instances @ model.weight.astype(jnp.float32) + model.bias
    assert label_scores.shape == (batch, num_classes)
    assert jnp.allclose(label_scores, ref, atol=1e-2, rtol=1e-2), (
        jnp.max(jnp.abs(label_scores - ref))
    )

    print("KERNEL_OK")
</pallas_src>

<mosaic_0001>
module attributes {stable_mosaic.version = 11 : i64} {
  func.func @_head_kernel_fused(%arg0: i32, %arg1: i32, %arg2: memref<8x128xbf16, #tpu.memory_space<vmem>>, %arg3: memref<128x128xbf16, #tpu.memory_space<vmem>>, %arg4: memref<1x128xf32, #tpu.memory_space<vmem>>, %arg5: memref<8x128xf32, #tpu.memory_space<vmem>>) attributes {dimension_semantics = [#tpu.dimension_semantics<parallel>, #tpu.dimension_semantics<parallel>], iteration_bounds = array<i64: 1, 1>, scalar_prefetch = 0 : i64, scratch_operands = 0 : i64, tpu.core_type = #tpu.core_type<tc>, window_params = [{transform_indices = @transform_0, window_bounds = array<i64: 8, 128>}, {transform_indices = @transform_1, window_bounds = array<i64: 128, 128>}, {transform_indices = @transform_2, window_bounds = array<i64: 1, 128>}, {transform_indices = @transform_3, window_bounds = array<i64: 8, 128>}]} {
    %c0 = arith.constant 0 : index
    %c0_0 = arith.constant 0 : index
    %0 = vector.load %arg2[%c0, %c0_0] : memref<8x128xbf16, #tpu.memory_space<vmem>>, vector<8x128xbf16>
    %c0_1 = arith.constant 0 : index
    %c0_2 = arith.constant 0 : index
    %1 = vector.load %arg3[%c0_1, %c0_2] : memref<128x128xbf16, #tpu.memory_space<vmem>>, vector<128x128xbf16>
    %cst = arith.constant dense<0.000000e+00> : vector<8x128xf32>
    %2 = tpu.matmul %0, %1, %cst {dimension_numbers = #tpu.dot_dimension_numbers<[1], [0], [0], [1], [0, 0, 1, 1], [], []>} : vector<8x128xbf16>, vector<128x128xbf16>, vector<8x128xf32> -> vector<8x128xf32>
    %c0_3 = arith.constant 0 : index
    %c0_4 = arith.constant 0 : index
    %3 = vector.load %arg4[%c0_3, %c0_4] : memref<1x128xf32, #tpu.memory_space<vmem>>, vector<1x128xf32>
    %4 = vector.broadcast %3 : vector<1x128xf32> to vector<8x128xf32>
    %5 = arith.addf %2, %4 : vector<8x128xf32>
    %c0_5 = arith.constant 0 : index
    %c0_6 = arith.constant 0 : index
    %6 = vector.load %arg5[%c0_5, %c0_6] : memref<8x128xf32, #tpu.memory_space<vmem>>, vector<8x128xf32>
    tpu.vector_store %arg5[%c0_5, %c0_6], %5 {strides = array<i32>} : memref<8x128xf32, #tpu.memory_space<vmem>>, vector<8x128xf32>,
    return
  }
  func.func @transform_0(%arg0: i32, %arg1: i32) -> (i32, i32) {
    %c0_i32 = arith.constant 0 : i32
    %c0_i32_0 = arith.constant 0 : i32
    return %arg1, %c0_i32 : i32, i32
  }
  func.func @transform_1(%arg0: i32, %arg1: i32) -> (i32, i32) {
    %c0_i32 = arith.constant 0 : i32
    %c0_i32_0 = arith.constant 0 : i32
    return %c0_i32, %arg0 : i32, i32
  }
  func.func @transform_2(%arg0: i32, %arg1: i32) -> (i32, i32) {
    %c0_i32 = arith.constant 0 : i32
    %c0_i32_0 = arith.constant 0 : i32
    return %c0_i32, %arg0 : i32, i32
  }
  func.func @transform_3(%arg0: i32, %arg1: i32) -> (i32, i32) {
    %c0_i32 = arith.constant 0 : i32
    return %arg1, %arg0 : i32, i32
  }
}

</mosaic_0001>

<llo_original>
// kernel: tpu_custom_call.1
$region0: #{tpu_custom_call.1}
  #allocation0 [shape = 'u32[]', space=smem, size = 0x4, offset = 0x4, fixed_abs, tag = 'smem constant byte address 0x4 - core index']
  #allocation1 [shape = 'u32[144,128]{1,0:T(1,128)}', space=vmem, size = 0x12000, scoped, tag = 'internal scratch']
  %s0 = inlined_call_operand.hbm [shape: bf16[8,128], index: 0, kind: input, shape index: {}]
  %s1 = inlined_call_operand.hbm [shape: bf16[128,128], index: 1, kind: input, shape index: {}]
  %s2 = inlined_call_operand.vmem [shape: f32[1,128], index: 2, kind: input, shape index: {}]
  %s3 = inlined_call_operand.hbm [shape: f32[8,128], index: 3, kind: output, shape index: {}]
  %s4 = sld [smem:[#allocation0]]
  $region30: #{tpu_custom_call.1} parent=0
    _
  %s6 = ssub.s32 1, %s4
  %s7 = scalar_select 0, %s6, %s4
  $region1: #{tpu_custom_call.1} parent=0
    #allocation2 [shape = 'u8[2048]{0}', space=vmem, size = 0x800, scoped, tag = 'input window, operand 0, single buffered']
    #allocation3 [shape = 's32[1]{0}', space=sflag, size = 0x4, scoped, tag = 'scoped memory for tpu_custom_call.1']
    #allocation4 [shape = 's32[1]{0}', space=sflag, size = 0x4, scoped, tag = 'scoped memory for tpu_custom_call.1']
    #allocation5 [shape = 'u8[32768]{0}', space=vmem, size = 0x8000, scoped, tag = 'input window, operand 1, single buffered']
    #allocation6 [shape = 's32[1]{0}', space=sflag, size = 0x4, scoped, tag = 'scoped memory for tpu_custom_call.1']
    #allocation7 [shape = 'u8[4096]{0}', space=vmem, size = 0x1000, scoped, tag = 'output window, operand 0, single buffered']
    %8 = vsyncpa [#allocation3], 0
    %9 = vsyncpa [#allocation6], 0
    %10 = vsyncpa [#allocation4], 0
    // Predicated region
    $region2: #{tpu_custom_call.1} parent=1 // pred_check
      _
    $region3: #{tpu_custom_call.1} parent=1 // pred_check_branch
      %12 = sbr.rel (0) target = $region5
    $region4: #{tpu_custom_call.1} parent=1 // pred_region
      %s14 = ssub.s32 64, 64
      %15 = vsyncadd [#allocation3], %s14
      %s17 = sshll.u32 [#allocation2], 4
      %s18 = int_to_ptr.vmem [resolvable:$true] %s17
      %20 = dma.hbm_to_vmem [thread:$0]  %s0, 64, %s18, [#allocation3]
    $region5: #{tpu_custom_call.1} parent=1 // pred_fallthru
      _
    // Predicated region
    $region6: #{tpu_custom_call.1} parent=1 // pred_check
      _
    $region7: #{tpu_custom_call.1} parent=1 // pred_check_branch
      %22 = sbr.rel (0) target = $region9
    $region8: #{tpu_custom_call.1} parent=1 // pred_region
      %s24 = ssub.s32 1024, 1024
      %25 = vsyncadd [#allocation6], %s24
      %s26 = sshll.u32 [#allocation5], 4
      %s27 = int_to_ptr.vmem [resolvable:$true] %s26
      %32 = dma.hbm_to_vmem [thread:$0]  %s1, 1024, %s27, [#allocation6], 64, 64, 4
    $region9: #{tpu_custom_call.1} parent=1 // pred_fallthru
      _
    // Predicated region
    $region10: #{tpu_custom_call.1} parent=1 // pred_check
      _
    $region11: #{tpu_custom_call.1} parent=1 // pred_check_branch
      %34 = sbr.rel (0) target = $region13
    $region12: #{tpu_custom_call.1} parent=1 // pred_region
      _
    $region13: #{tpu_custom_call.1} parent=1 // pred_fallthru
      _
    // Predicated region
    $region14: #{tpu_custom_call.1} parent=1 // pred_check
      _
    $region15: #{tpu_custom_call.1} parent=1 // pred_check_branch
      %36 = sbr.rel (0) target = $region17
    $region16: #{tpu_custom_call.1} parent=1 // pred_region
      %37 = dma.done [#allocation3], 64
    $region17: #{tpu_custom_call.1} parent=1 // pred_fallthru
      _
    // Predicated region
    $region18: #{tpu_custom_call.1} parent=1 // pred_check
      _
    $region19: #{tpu_custom_call.1} parent=1 // pred_check_branch
      %39 = sbr.rel (0) target = $region21
    $region20: #{tpu_custom_call.1} parent=1 // pred_region
      %40 = dma.done [#allocation6], 1024
    $region21: #{tpu_custom_call.1} parent=1 // pred_fallthru
      _
    %v42 = vld [vmem:[#allocation2] sm:$0xf]
    %v43 = vld [vmem:[#allocation5] sm:$0xf]
    %v44 = vld [vmem:[#allocation5 + $0x4] sm:$0xf]
    %v45 = vld [vmem:[#allocation5 + $0x8] sm:$0xf]
    %v46 = vld [vmem:[#allocation5 + $0xc] sm:$0xf]
    %v47 = vld [vmem:[#allocation5 + $0x10] sm:$0xf]
    %v48 = vld [vmem:[#allocation5 + $0x14] sm:$0xf]
    %v49 = vld [vmem:[#allocation5 + $0x18] sm:$0xf]
    %v50 = vld [vmem:[#allocation5 + $0x1c] sm:$0xf]
    %v51 = vld [vmem:[#allocation5 + $0x20] sm:$0xf]
    %v52 = vld [vmem:[#allocation5 + $0x24] sm:$0xf]
    %v53 = vld [vmem:[#allocation5 + $0x28] sm:$0xf]
    %v54 = vld [vmem:[#allocation5 + $0x2c] sm:$0xf]
    %v55 = vld [vmem:[#allocation5 + $0x30] sm:$0xf]
    %v56 = vld [vmem:[#allocation5 + $0x34] sm:$0xf]
    %v57 = vld [vmem:[#allocation5 + $0x38] sm:$0xf]
    %v58 = vld [vmem:[#allocation5 + $0x3c] sm:$0xf]
    %v59 = vld [vmem:[%s2] sm:$0x1]
    %v61 = vlaneseq
    %v62 = vshrl.u32 %v61, 7
    %v63 = vsub.s32 0, %v62
    %v64 = vrot.slane %v59, %v63
    %v82 = vunpack.c.l.b16 %v43
    %v83 = vunpack.c.l.b16 %v44
    %v84 = vunpack.c.l.b16 %v45
    %v85 = vunpack.c.l.b16 %v46
    %v86 = vunpack.c.l.b16 %v47
    %v87 = vunpack.c.l.b16 %v48
    %v88 = vunpack.c.l.b16 %v49
    %v89 = vunpack.c.l.b16 %v50
    %v90 = vunpack.c.l.b16 %v51
    %v91 = vunpack.c.l.b16 %v52
    %v92 = vunpack.c.l.b16 %v53
    %v93 = vunpack.c.l.b16 %v54
    %v94 = vunpack.c.l.b16 %v55
    %v95 = vunpack.c.l.b16 %v56
    %v96 = vunpack.c.l.b16 %v57
    %v97 = vunpack.c.l.b16 %v58
    %v98 = vpack.c.b16 %v83, %v82
    %v99 = vpack.c.b16 %v85, %v84
    %v100 = vpack.c.b16 %v87, %v86
    %v101 = vpack.c.b16 %v89, %v88
    %v102 = vpack.c.b16 %v91, %v90
    %v103 = vpack.c.b16 %v93, %v92
    %v104 = vpack.c.b16 %v95, %v94
    %v105 = vpack.c.b16 %v97, %v96
    %114 = vmatprep.subr.bf16.mxu0 0
    %115 = vmatpush1.bf16.msra.mxu0 %v105
    %116 = vmatprep.subr.bf16.mxu0 0
    %117 = vmatpush1.bf16.msra.mxu0 %v104
    %118 = vmatprep.subr.bf16.mxu0 0
    %119 = vmatpush1.bf16.msra.mxu0 %v103
    %120 = vmatprep.subr.bf16.mxu0 0
    %121 = vmatpush1.bf16.msra.mxu0 %v102
    %122 = vmatprep.subr.bf16.mxu0 0
    %123 = vmatpush1.bf16.msra.mxu0 %v101
    %124 = vmatprep.subr.bf16.mxu0 0
    %125 = vmatpush1.bf16.msra.mxu0 %v100
    %126 = vmatprep.subr.bf16.mxu0 0
    %127 = vmatpush1.bf16.msra.mxu0 %v99
    %128 = vmatprep.subr.bf16.mxu0 0
    %129 = vmatpush1.bf16.msra.mxu0 %v98
    %130 = vmatprep.subr.bf16.mxu0 0
    %131 = vmatpush2.bf16.msra.mxu0 0
    %132 = vmatprep.subr.bf16.mxu0 0
    %133 = vmatpush2.bf16.msra.mxu0 0
    %134 = vmatprep.subr.bf16.mxu0 0
    %135 = vmatpush2.bf16.msra.mxu0 0
    %136 = vmatprep.subr.bf16.mxu0 0
    %137 = vmatpush2.bf16.msra.mxu0 0
    %138 = vmatprep.subr.bf16.mxu0 0
    %139 = vmatpush2.bf16.msra.mxu0 0
    %140 = vmatprep.subr.bf16.mxu0 0
    %141 = vmatpush2.bf16.msra.mxu0 0
    %142 = vmatprep.subr.bf16.mxu0 0
    %143 = vmatpush2.bf16.msra.mxu0 0
    %144 = vmatprep.subr.bf16.mxu0 0
    %145 = vmatpush2.bf16.msra.mxu0 0
    %146 = vmatprep.mubr.bf16.mxu0 0
    %147 = vmatmul.mubr.bf16.gmra.mxu0 %v42
    %v148 = vpop.f32.mrf.mxu0
    %v149 = vadd.f32 %v64, %v148
    %v150 = vpop.f32.mrf.mxu0
    %v151 = vpop.f32.mrf.mxu0
    %v152 = vpop.f32.mrf.mxu0
    %153 = vdwg.mxu0
    %154 = vst [vmem:[#allocation7] sm:$0xff] %v149
    // Predicated region
    $region22: #{tpu_custom_call.1} parent=1 // pred_check
      _
    $region23: #{tpu_custom_call.1} parent=1 // pred_check_branch
      %156 = sbr.rel (0) target = $region25
    $region24: #{tpu_custom_call.1} parent=1 // pred_region
      %s158 = ssub.s32 128, 128
      %159 = vsyncadd [#allocation4], %s158
      %s161 = sshll.u32 [#allocation7], 4
      %s162 = int_to_ptr.vmem [resolvable:$true] %s161
      %164 = dma.vmem_to_hbm [thread:$0]  %s162, 128, %s3, [#allocation4]
    $region25: #{tpu_custom_call.1} parent=1 // pred_fallthru
      _
    // Predicated region
    $region26: #{tpu_custom_call.1} parent=1 // pred_check
      _
    $region27: #{tpu_custom_call.1} parent=1 // pred_check_branch
      %166 = sbr.rel (0) target = $region29
    $region28: #{tpu_custom_call.1} parent=1 // pred_region
      %167 = dma.done [#allocation4], 128
    $region29: #{tpu_custom_call.1} parent=1 // pred_fallthru
      _
    %168 = vsyncpa [#allocation3], 1
    %169 = vsyncpa [#allocation6], 1
    %170 = vsyncpa [#allocation4], 1

</llo_original>
